<compile_context>
chip_gen: v7x
topology: tpu7x:2x2x1
jax: 0.10.0
libtpu: 0.0.40
codegen_flags: <defaults>
</compile_context>

<pallas_src>
import functools
import math

import jax
import jax.numpy as jnp
import jax.random as jr
from jax.experimental import pallas as pl
from jax.experimental.pallas import tpu as pltpu

# Explicit scoped-VMEM request: raises v5e's 16 MiB default, matches v6e/v7x default,
# stays well under v7x's 64 MiB physical VMEM. Worst-case tile sets below use <~13 MiB.
_VMEM_LIMIT = 32 * 1024 * 1024


def _round_up(x, m):
    return (x + m - 1) // m * m


# ---------------------------------------------------------------------------
# Fused matmul + bias (+residual) (+ReLU) Pallas kernels (1x1 convs, im2col convs)
# ---------------------------------------------------------------------------

def _mm_kernel(apply_relu, x_ref, w_ref, b_ref, o_ref, acc_ref):
    k = pl.program_id(2)

    @pl.when(k == 0)
    def _():
        acc_ref[...] = jnp.zeros_like(acc_ref)

    acc_ref[...] += jnp.dot(x_ref[...], w_ref[...], preferred_element_type=jnp.float32)

    @pl.when(k == pl.num_programs(2) - 1)
    def _():
        y = acc_ref[...] + b_ref[...].astype(jnp.float32)
        if apply_relu:
            y = jnp.maximum(y, 0.0)
        o_ref[...] = y.astype(o_ref.dtype)


def _mm_res_kernel(apply_relu, x_ref, w_ref, b_ref, r_ref, o_ref, acc_ref):
    k = pl.program_id(2)

    @pl.when(k == 0)
    def _():
        acc_ref[...] = jnp.zeros_like(acc_ref)

    acc_ref[...] += jnp.dot(x_ref[...], w_ref[...], preferred_element_type=jnp.float32)

    @pl.when(k == pl.num_programs(2) - 1)
    def _():
        y = acc_ref[...] + b_ref[...].astype(jnp.float32) + r_ref[...].astype(jnp.float32)
        if apply_relu:
            y = jnp.maximum(y, 0.0)
        o_ref[...] = y.astype(o_ref.dtype)


def fused_matmul(x, w, bias, residual=None, relu=False, out_dtype=jnp.bfloat16):
    """out = maybe_relu((x @ w) + bias [+ residual]); bf16 MXU, f32 accumulate."""
    M, K = x.shape
    Kw, N = w.shape
    assert K == Kw, (K, Kw)

    if M >= 1024:
        Mp, tm = _round_up(M, 256), 256
    else:
        Mp = _round_up(M, 16)
        tm = next(c for c in (256, 128, 64, 32, 16) if Mp % c == 0)
    Kp = _round_up(K, 128)
    Np = _round_up(N, 128)
    # tk >= 256 where the shape allows (256-deep MXU on v6e/v7x); 384/768 cover the
    # 9*C contractions of the remaining strided 3x3 convs (K = 1152 / 2304).
    tk = next(c for c in (512, 768, 384, 256, 128) if Kp % c == 0)
    # Large tn so the X panel is streamed from HBM exactly once for the wide-N
    # layers (N = 1024 / 2048). VMEM at tm=256, tk=768, tn=2048 is ~11 MiB.
    tn = next(c for c in (2048, 1024, 512, 256, 128) if Np % c == 0)

    xb = x.astype(jnp.bfloat16)
    if (Mp, Kp) != (M, K):
        xb = jnp.pad(xb, ((0, Mp - M), (0, Kp - K)))  # K zero-padded together with w rows
    wb = w.astype(jnp.bfloat16)
    if (Kp, Np) != (K, N):
        wb = jnp.pad(wb, ((0, Kp - K), (0, Np - N)))
    bb = bias.astype(jnp.float32).reshape(1, N)
    if Np != N:
        bb = jnp.pad(bb, ((0, 0), (0, Np - N)))

    x_spec = pl.BlockSpec((tm, tk), lambda i, j, k: (i, k))
    w_spec = pl.BlockSpec((tk, tn), lambda i, j, k: (k, j))
    b_spec = pl.BlockSpec((1, tn), lambda i, j, k: (0, j))
    o_spec = pl.BlockSpec((tm, tn), lambda i, j, k: (i, j))

    if residual is None:
        kernel = functools.partial(_mm_kernel, relu)
        in_specs = [x_spec, w_spec, b_spec]
        operands = (xb, wb, bb)
    else:
        rb = residual.astype(jnp.bfloat16)
        if (Mp, Np) != rb.shape:
            rb = jnp.pad(rb, ((0, Mp - rb.shape[0]), (0, Np - rb.shape[1])))
        kernel = functools.partial(_mm_res_kernel, relu)
        r_spec = pl.BlockSpec((tm, tn), lambda i, j, k: (i, j))
        in_specs = [x_spec, w_spec, b_spec, r_spec]
        operands = (xb, wb, bb, rb)

    out = pl.pallas_call(
        kernel,
        out_shape=jax.ShapeDtypeStruct((Mp, Np), out_dtype),
        grid_spec=pltpu.PrefetchScalarGridSpec(
            num_scalar_prefetch=0,
            grid=(Mp // tm, Np // tn, Kp // tk),
            in_specs=in_specs,
            out_specs=o_spec,
            scratch_shapes=[pltpu.VMEM((tm, tn), jnp.float32)],
        ),
        compiler_params=pltpu.CompilerParams(
            dimension_semantics=("parallel", "parallel", "arbitrary"),
            vmem_limit_bytes=_VMEM_LIMIT,
        ),
    )(*operands)
    return out[:M, :N]


# ---------------------------------------------------------------------------
# Stride-1 KxK conv WITHOUT HBM im2col:
#   flat padded activation + overlapping row-windows + in-kernel (kh,kw) taps.
# ---------------------------------------------------------------------------

def _conv_flat_kernel(offsets, apply_relu, x_ref, w_ref, b_ref, o_ref, acc_ref):
    tm = o_ref.shape[0]
    acc_ref[...] = jnp.zeros_like(acc_ref)
    # Static unrolled loop over the k*k kernel taps: each tap is a shifted view of
    # the VMEM row-window matmul'd against its (C, Cout) weight slab.
    for idx, off in enumerate(offsets):
        xs = x_ref[0, off:off + tm, :]
        acc_ref[...] += jnp.dot(xs, w_ref[idx], preferred_element_type=jnp.float32)
    y = acc_ref[...] + b_ref[...]
    if apply_relu:
        y = jnp.maximum(y, 0.0)
    o_ref[...] = y.astype(o_ref.dtype)


def conv_unit_stride(x, p, relu=True):
    """KxK stride-1 conv + folded BN (+ReLU). x: NHWC bf16. No 9x im2col in HBM."""
    N, H, W, C = x.shape
    k, pad = p["k"], p["p"]
    Hp, Wp = H + 2 * pad, W + 2 * pad
    Ho, Wo = Hp - k + 1, Wp - k + 1
    kk = k * k
    Cout = p["bias"].shape[0]

    xpad = jnp.pad(x.astype(jnp.bfloat16), ((0, 0), (pad, pad), (pad, pad), (0, 0)))
    # Compute the conv at every padded position (flat index q = h*Wp + w); valid
    # outputs (h < Ho, w < Wo) only read inside their own image's padded grid,
    # garbage positions are sliced away at the end.
    M = N * Hp * Wp
    halo = (k - 1) * Wp + (k - 1)          # largest flat offset of a kernel tap

    Mp = _round_up(M, 16)
    T = -(-Mp // 512)                       # M tiles, tm <= 512
    tm = _round_up(-(-Mp // T), 16)
    Mpad = T * tm

    xflat = xpad.reshape(M, C)
    xflat = jnp.pad(xflat, ((0, Mpad + halo - M), (0, 0)))
    # Overlapping row-windows: ~(tm+halo)/tm copy (1.05-1.25x) instead of 9x im2col.
    windows = jnp.stack([xflat[t * tm: t * tm + tm + halo] for t in range(T)])

    wk = p["w"].reshape(kk, C, Cout)        # (kh, kw) slabs, same ordering as offsets
    bias = p["bias"].astype(jnp.float32).reshape(1, Cout)
    offsets = tuple(i * Wp + j for i in range(k) for j in range(k))

    out = pl.pallas_call(
        functools.partial(_conv_flat_kernel, offsets, relu),
        out_shape=jax.ShapeDtypeStruct((Mpad, Cout), jnp.bfloat16),
        grid_spec=pltpu.PrefetchScalarGridSpec(
            num_scalar_prefetch=0,
            grid=(T,),
            in_specs=[
                pl.BlockSpec((1, tm + halo, C), lambda t: (t, 0, 0)),
                pl.BlockSpec((kk, C, Cout), lambda t: (0, 0, 0)),   # weight resident
                pl.BlockSpec((1, Cout), lambda t: (0, 0)),
            ],
            out_specs=pl.BlockSpec((tm, Cout), lambda t: (t, 0)),
            scratch_shapes=[pltpu.VMEM((tm, Cout), jnp.float32)],
        ),
        compiler_params=pltpu.CompilerParams(
            dimension_semantics=("parallel",),
            vmem_limit_bytes=_VMEM_LIMIT,
        ),
    )(windows, wk, bias)

    out = out[:M].reshape(N, Hp, Wp, Cout)[:, :Ho, :Wo, :]
    return out


# ---------------------------------------------------------------------------
# Glue: im2col (strided convs only), conv dispatch, maxpool
# ---------------------------------------------------------------------------

def _extract_patches(x, k, s, pad, pad_value=0.0):
    """x: (N,H,W,C) -> (N,Ho,Wo,k*k*C), (kh, kw, c) ordering."""
    N, H, W, C = x.shape
    Ho = (H + 2 * pad - k) // s + 1
    Wo = (W + 2 * pad - k) // s + 1
    xp = jnp.pad(x, ((0, 0), (pad, pad), (pad, pad), (0, 0)), constant_values=pad_value)
    pieces = []
    for i in range(k):
        for j in range(k):
            pieces.append(xp[:, i:i + s * (Ho - 1) + 1:s, j:j + s * (Wo - 1) + 1:s, :])
    return jnp.concatenate(pieces, axis=-1), Ho, Wo


def conv_bn_act(x, p, relu=True, residual=None):
    """Conv + folded BN (+ residual) (+ ReLU). x: NHWC bf16."""
    N, H, W, C = x.shape
    k, s = p["k"], p["s"]
    if k == 1:
        # 1x1 conv: plain (strided) reshape, no patch extraction at all.
        xs = x if s == 1 else x[:, ::s, ::s, :]
        Ho, Wo = xs.shape[1], xs.shape[2]
        xm = xs.reshape(N * Ho * Wo, C)
        rm = residual.reshape(N * Ho * Wo, -1) if residual is not None else None
        y = fused_matmul(xm, p["w"], p["bias"], residual=rm, relu=relu)
        return y.reshape(N, Ho, Wo, -1)
    if s == 1 and residual is None:
        return conv_unit_stride(x, p, relu=relu)
    # Strided k>1 convs (7x7 stem, three stride-2 3x3 convs) keep the im2col path.
    patches, Ho, Wo = _extract_patches(x, k, s, p["p"])
    xm = patches.reshape(N * Ho * Wo, k * k * C)
    rm = residual.reshape(N * Ho * Wo, -1) if residual is not None else None
    y = fused_matmul(xm, p["w"], p["bias"], residual=rm, relu=relu)
    return y.reshape(N, Ho, Wo, -1)


def maxpool_3x3_s2_p1(x):
    # Running maximum over the 9 shifted slices: no 9x-expanded HBM intermediate.
    N, H, W, C = x.shape
    Ho = (H + 2 - 3) // 2 + 1
    Wo = (W + 2 - 3) // 2 + 1
    xp = jnp.pad(x, ((0, 0), (1, 1), (1, 1), (0, 0)), constant_values=-jnp.inf)
    out = None
    for i in range(3):
        for j in range(3):
            s = xp[:, i:i + 2 * (Ho - 1) + 1:2, j:j + 2 * (Wo - 1) + 1:2, :]
            out = s if out is None else jnp.maximum(out, s)
    return out


# ---------------------------------------------------------------------------
# Deterministic parameter init (ResNet50 topology + classifier head).
# BN folded into the matmul: scale into the weights, shift stays as an f32 bias.
# ---------------------------------------------------------------------------

def init_conv_bn(key, cin, cout, ksize, stride, pad):
    k1, k2, k3 = jr.split(key, 3)
    fan_in = cin * ksize * ksize
    w = jr.normal(k1, (ksize, ksize, cin, cout), jnp.float32) * (0.5 * math.sqrt(2.0 / fan_in))
    scale = 1.0 + 0.05 * jr.normal(k2, (cout,), jnp.float32)   # folded gamma/sqrt(var+eps)
    bias = 0.05 * jr.normal(k3, (cout,), jnp.float32)          # folded beta - mean*scale
    w = w.reshape(ksize * ksize * cin, cout) * scale[None, :]  # fold BN scale into weights
    return dict(w=w.astype(jnp.bfloat16), bias=bias, k=ksize, s=stride, p=pad)


def init_bottleneck(key, cin, mid, cout, stride):
    ks = jr.split(key, 4)
    down = None
    if stride != 1 or cin != cout:
        down = init_conv_bn(ks[3], cin, cout, 1, stride, 0)
    return dict(
        conv1=init_conv_bn(ks[0], cin, mid, 1, 1, 0),
        conv2=init_conv_bn(ks[1], mid, mid, 3, stride, 1),
        conv3=init_conv_bn(ks[2], mid, cout, 1, 1, 0),
        down=down,
    )


_RESNET50_CFG = [(64, 256, 3, 1), (128, 512, 4, 2), (256, 1024, 6, 2), (512, 2048, 3, 2)]


def init_resnet50(key):
    keys = jr.split(key, 5)
    params = {"stem": init_conv_bn(keys[0], 3, 64, 7, 2, 3), "layers": []}
    cin = 64
    for idx, (mid, cout, nblocks, stride) in enumerate(_RESNET50_CFG):
        bkeys = jr.split(keys[idx + 1], nblocks)
        blocks = []
        for b in range(nblocks):
            s = stride if b == 0 else 1
            blocks.append(init_bottleneck(bkeys[b], cin, mid, cout, s))
            cin = cout
        params["layers"].append(blocks)
    return params


def init_classifier(key, num_features=2048, num_classes=10):
    ks = jr.split(key, 8)

    def linear_bn(kw, kb, ks_, kbeta, din, dout):
        w = jr.normal(kw, (din, dout), jnp.float32) / math.sqrt(din)
        b = 0.05 * jr.normal(kb, (dout,), jnp.float32)
        scale = 1.0 + 0.05 * jr.normal(ks_, (dout,), jnp.float32)
        beta = 0.05 * jr.normal(kbeta, (dout,), jnp.float32)
        # fold: (xW + b) * scale + beta == x(W*scale) + (b*scale + beta)
        return dict(w=(w * scale[None, :]).astype(jnp.bfloat16), bias=b * scale + beta)

    fc1 = linear_bn(ks[0], ks[1], ks[2], ks[3], num_features, 512)
    fc2 = linear_bn(ks[4], ks[5], ks[6], ks[7], 512, 256)
    k3w, k3b = jr.split(jr.fold_in(key, 99), 2)
    fc3 = dict(
        w=(jr.normal(k3w, (256, num_classes), jnp.float32) / math.sqrt(256)).astype(jnp.bfloat16),
        bias=0.05 * jr.normal(k3b, (num_classes,), jnp.float32),
    )
    return dict(fc1=fc1, fc2=fc2, fc3=fc3)


# ---------------------------------------------------------------------------
# Fused classifier head: (Linear+BN+ReLU) -> (Linear+BN+ReLU) -> Linear in ONE call.
# ---------------------------------------------------------------------------

def _head_kernel(x_ref, w1_ref, b1_ref, w2_ref, b2_ref, w3_ref, b3_ref, o_ref):
    h = jnp.dot(x_ref[...], w1_ref[...], preferred_element_type=jnp.float32)
    h = jnp.maximum(h + b1_ref[...], 0.0).astype(jnp.bfloat16)
    h = jnp.dot(h, w2_ref[...], preferred_element_type=jnp.float32)
    h = jnp.maximum(h + b2_ref[...], 0.0).astype(jnp.bfloat16)
    o_ref[...] = jnp.dot(h, w3_ref[...], preferred_element_type=jnp.float32) + b3_ref[...]


def classifier_fwd(feats, p):
    # Dropout is identity in eval mode; BN1d is folded into the linear weights.
    M, _ = feats.shape
    num_classes = p["fc3"]["w"].shape[1]
    Mp = _round_up(max(M, 8), 8)
    NCp = _round_up(num_classes, 128)

    x = jnp.pad(feats.astype(jnp.bfloat16), ((0, Mp - M), (0, 0)))
    w1 = p["fc1"]["w"]
    b1 = p["fc1"]["bias"].astype(jnp.float32).reshape(1, -1)
    w2 = p["fc2"]["w"]
    b2 = p["fc2"]["bias"].astype(jnp.float32).reshape(1, -1)
    w3 = jnp.pad(p["fc3"]["w"], ((0, 0), (0, NCp - num_classes)))
    b3 = jnp.pad(p["fc3"]["bias"].astype(jnp.float32), ((0, NCp - num_classes),)).reshape(1, NCp)

    def spec2d(shape):
        return pl.BlockSpec(shape, lambda i: (0, 0))

    out = pl.pallas_call(
        _head_kernel,
        out_shape=jax.ShapeDtypeStruct((Mp, NCp), jnp.float32),
        grid_spec=pltpu.PrefetchScalarGridSpec(
            num_scalar_prefetch=0,
            grid=(1,),
            in_specs=[spec2d(x.shape), spec2d(w1.shape), spec2d(b1.shape),
                      spec2d(w2.shape), spec2d(b2.shape),
                      spec2d(w3.shape), spec2d(b3.shape)],
            out_specs=spec2d((Mp, NCp)),
        ),
        compiler_params=pltpu.CompilerParams(
            dimension_semantics=("arbitrary",),
            vmem_limit_bytes=_VMEM_LIMIT,
        ),
    )(x, w1, b1, w2, b2, w3, b3)
    return out[:M, :num_classes]


# ---------------------------------------------------------------------------
# Forward pass
# ---------------------------------------------------------------------------

def bottleneck_fwd(x, p):
    identity = x if p["down"] is None else conv_bn_act(x, p["down"], relu=False)
    out = conv_bn_act(x, p["conv1"], relu=True)
    out = conv_bn_act(out, p["conv2"], relu=True)
    # fused conv3 + folded BN + residual add + ReLU in a single Pallas call
    out = conv_bn_act(out, p["conv3"], relu=True, residual=identity)
    return out


def resnet50_fwd(x_nhwc, params):
    h = conv_bn_act(x_nhwc.astype(jnp.bfloat16), params["stem"], relu=True)
    h = maxpool_3x3_s2_p1(h)
    for blocks in params["layers"]:
        for bp in blocks:
            h = bottleneck_fwd(h, bp)
    # global average pool -> (N, 2048), reduced in f32
    return jnp.mean(h.astype(jnp.float32), axis=(1, 2))


def crop_disease_model_fwd(x_nchw, resnet_params, cls_params):
    x_nhwc = jnp.transpose(x_nchw, (0, 2, 3, 1))
    feats = resnet50_fwd(x_nhwc, resnet_params)
    return classifier_fwd(feats, cls_params)


# ---------------------------------------------------------------------------

if __name__ == "__main__":
    num_classes = 10
    key = jr.PRNGKey(0)
    k_res, k_cls, k_x = jr.split(key, 3)

    resnet_params = init_resnet50(k_res)
    cls_params = init_classifier(k_cls, num_features=2048, num_classes=num_classes)

    # Small deterministic input (PyTorch NCHW convention: batch=2, 3 channels, 16x16).
    x = jr.normal(k_x, (2, 3, 16, 16), jnp.float32)

    out = crop_disease_model_fwd(x, resnet_params, cls_params)
    out = jax.block_until_ready(out)

    assert out.shape == (2, num_classes), out.shape
    assert bool(jnp.all(jnp.isfinite(out)))
    print("KERNEL_OK")
</pallas_src>

<mosaic_0001>
module attributes {stable_mosaic.version = 11 : i64} {
  func.func @_mm_kernel(%arg0: i32, %arg1: i32, %arg2: i32, %arg3: memref<128x256xbf16, #tpu.memory_space<vmem>>, %arg4: memref<256x128xbf16, #tpu.memory_space<vmem>>, %arg5: memref<1x128xf32, #tpu.memory_space<vmem>>, %arg6: memref<128x128xbf16, #tpu.memory_space<vmem>>, %arg7: memref<128x128xf32, #tpu.memory_space<vmem>>) attributes {dimension_semantics = [#tpu.dimension_semantics<parallel>, #tpu.dimension_semantics<parallel>, #tpu.dimension_semantics<arbitrary>], iteration_bounds = array<i64: 1, 1, 1>, scalar_prefetch = 0 : i64, scratch_operands = 1 : i64, tpu.core_type = #tpu.core_type<tc>, window_params = [{transform_indices = @transform_0, window_bounds = array<i64: 128, 256>}, {transform_indices = @transform_1, window_bounds = array<i64: 256, 128>}, {transform_indices = @transform_2, window_bounds = array<i64: 1, 128>}, {transform_indices = @transform_3, window_bounds = array<i64: 128, 128>}]} {
    %c0_i32 = arith.constant 0 : i32
    %0 = arith.cmpi eq, %arg2, %c0_i32 : i32
    %1 = arith.extui %0 : i1 to i32
    %c0_i32_0 = arith.constant 0 : i32
    %2 = arith.cmpi ne, %1, %c0_i32_0 : i32
    scf.if %2 {
      %cst_10 = arith.constant 0.000000e+00 : f32
      %12 = vector.broadcast %cst_10 : f32 to vector<128x128xf32>
      %c0_11 = arith.constant 0 : index
      %c0_12 = arith.constant 0 : index
      %13 = vector.load %arg7[%c0_11, %c0_12] : memref<128x128xf32, #tpu.memory_space<vmem>>, vector<128x128xf32>
      tpu.vector_store %arg7[%c0_11, %c0_12], %12 {strides = array<i32>} : memref<128x128xf32, #tpu.memory_space<vmem>>, vector<128x128xf32>,
    } else {
    }
    %c0 = arith.constant 0 : index
    %c0_1 = arith.constant 0 : index
    %3 = vector.load %arg7[%c0, %c0_1] : memref<128x128xf32, #tpu.memory_space<vmem>>, vector<128x128xf32>
    %c0_2 = arith.constant 0 : index
    %c0_3 = arith.constant 0 : index
    %4 = vector.load %arg3[%c0_2, %c0_3] : memref<128x256xbf16, #tpu.memory_space<vmem>>, vector<128x256xbf16>
    %c0_4 = arith.constant 0 : index
    %c0_5 = arith.constant 0 : index
    %5 = vector.load %arg4[%c0_4, %c0_5] : memref<256x128xbf16, #tpu.memory_space<vmem>>, vector<256x128xbf16>
    %cst = arith.constant dense<0.000000e+00> : vector<128x128xf32>
    %6 = tpu.matmul %4, %5, %cst {dimension_numbers = #tpu.dot_dimension_numbers<[1], [0], [0], [1], [0, 0, 1, 1], [], []>} : vector<128x256xbf16>, vector<256x128xbf16>, vector<128x128xf32> -> vector<128x128xf32>
    %7 = arith.addf %3, %6 : vector<128x128xf32>
    %c0_6 = arith.constant 0 : index
    %c0_7 = arith.constant 0 : index
    %8 = vector.load %arg7[%c0_6, %c0_7] : memref<128x128xf32, #tpu.memory_space<vmem>>, vector<128x128xf32>
    tpu.vector_store %arg7[%c0_6, %c0_7], %7 {strides = array<i32>} : memref<128x128xf32, #tpu.memory_space<vmem>>, vector<128x128xf32>,
    %c0_i32_8 = arith.constant 0 : i32
    %9 = arith.cmpi eq, %arg2, %c0_i32_8 : i32
    %10 = arith.extui %9 : i1 to i32
    %c0_i32_9 = arith.constant 0 : i32
    %11 = arith.cmpi ne, %10, %c0_i32_9 : i32
    scf.if %11 {
      %c0_10 = arith.constant 0 : index
      %c0_11 = arith.constant 0 : index
      %12 = vector.load %arg7[%c0_10, %c0_11] : memref<128x128xf32, #tpu.memory_space<vmem>>, vector<128x128xf32>
      %c0_12 = arith.constant 0 : index
      %c0_13 = arith.constant 0 : index
      %13 = vector.load %arg5[%c0_12, %c0_13] : memref<1x128xf32, #tpu.memory_space<vmem>>, vector<1x128xf32>
      %14 = vector.broadcast %13 : vector<1x128xf32> to vector<128x128xf32>
      %15 = arith.addf %12, %14 : vector<128x128xf32>
      %cst_14 = arith.constant 0.000000e+00 : f32
      %16 = vector.broadcast %cst_14 : f32 to vector<128x128xf32>
      %17 = arith.maximumf %15, %16 : vector<128x128xf32>
      %18 = arith.truncf %17 : vector<128x128xf32> to vector<128x128xbf16>
      %c0_15 = arith.constant 0 : index
      %c0_16 = arith.constant 0 : index
      %19 = vector.load %arg6[%c0_15, %c0_16] : memref<128x128xbf16, #tpu.memory_space<vmem>>, vector<128x128xbf16>
      tpu.vector_store %arg6[%c0_15, %c0_16], %18 {strides = array<i32>} : memref<128x128xbf16, #tpu.memory_space<vmem>>, vector<128x128xbf16>,
    } else {
    }
    return
  }
  func.func @transform_0(%arg0: i32, %arg1: i32, %arg2: i32) -> (i32, i32) {
    %c0_i32 = arith.constant 0 : i32
    return %arg0, %arg2 : i32, i32
  }
  func.func @transform_1(%arg0: i32, %arg1: i32, %arg2: i32) -> (i32, i32) {
    %c0_i32 = arith.constant 0 : i32
    return %arg2, %arg1 : i32, i32
  }
  func.func @transform_2(%arg0: i32, %arg1: i32, %arg2: i32) -> (i32, i32) {
    %c0_i32 = arith.constant 0 : i32
    %c0_i32_0 = arith.constant 0 : i32
    return %c0_i32, %arg1 : i32, i32
  }
  func.func @transform_3(%arg0: i32, %arg1: i32, %arg2: i32) -> (i32, i32) {
    %c0_i32 = arith.constant 0 : i32
    return %arg0, %arg1 : i32, i32
  }
}

</mosaic_0001>

<llo_original>
// kernel: tpu_custom_call.1
$region0: #{tpu_custom_call.1}
  #allocation0 [shape = 'u32[]', space=smem, size = 0x4, offset = 0x4, fixed_abs, tag = 'smem constant byte address 0x4 - core index']
  #allocation1 [shape = 'u32[144,128]{1,0:T(1,128)}', space=vmem, size = 0x12000, scoped, tag = 'internal scratch']
  #allocation2 [shape = 'f32[128,128]{1,0:T(8,128)}', space=vmem, size = 0x10000, scoped, tag = 'scratch operand']
  %s0 = inlined_call_operand.hbm [shape: bf16[128,256], index: 0, kind: input, shape index: {}]
  %s1 = inlined_call_operand.hbm [shape: bf16[256,128], index: 1, kind: input, shape index: {}]
  %s2 = inlined_call_operand.vmem [shape: f32[1,128], index: 2, kind: input, shape index: {}]
  %s3 = inlined_call_operand.hbm [shape: bf16[128,128], index: 3, kind: output, shape index: {}]
  %s4 = sld [smem:[#allocation0]]
  $region38: #{tpu_custom_call.1} parent=0
    _
  %s6 = ssub.s32 1, %s4
  %s7 = scalar_select 0, %s6, %s4
  $region1: #{tpu_custom_call.1} parent=0
    #allocation3 [shape = 'u8[65536]{0}', space=vmem, size = 0x10000, scoped, tag = 'input window, operand 0, single buffered']
    #allocation4 [shape = 's32[1]{0}', space=sflag, size = 0x4, scoped, tag = 'scoped memory for tpu_custom_call.1']
    #allocation5 [shape = 's32[1]{0}', space=sflag, size = 0x4, scoped, tag = 'scoped memory for tpu_custom_call.1']
    #allocation6 [shape = 'u8[65536]{0}', space=vmem, size = 0x10000, scoped, tag = 'input window, operand 1, single buffered']
    #allocation7 [shape = 's32[1]{0}', space=sflag, size = 0x4, scoped, tag = 'scoped memory for tpu_custom_call.1']
    #allocation8 [shape = 'u8[32768]{0}', space=vmem, size = 0x8000, scoped, tag = 'output window, operand 0, single buffered']
    %8 = vsyncpa [#allocation4], 0
    %9 = vsyncpa [#allocation7], 0
    %10 = vsyncpa [#allocation5], 0
    // Predicated region
    $region2: #{tpu_custom_call.1} parent=1 // pred_check
      _
    $region3: #{tpu_custom_call.1} parent=1 // pred_check_branch
      %12 = sbr.rel (0) target = $region5
    $region4: #{tpu_custom_call.1} parent=1 // pred_region
      %s14 = ssub.s32 2048, 2048
      %15 = vsyncadd [#allocation4], %s14
      %s16 = sshll.u32 [#allocation3], 4
      %s17 = int_to_ptr.vmem [resolvable:$true] %s16
      %22 = dma.hbm_to_vmem [thread:$0]  %s0, 2048, %s17, [#allocation4], 128, 128, 8
    $region5: #{tpu_custom_call.1} parent=1 // pred_fallthru
      _
    // Predicated region
    $region6: #{tpu_custom_call.1} parent=1 // pred_check
      _
    $region7: #{tpu_custom_call.1} parent=1 // pred_check_branch
      %24 = sbr.rel (0) target = $region9
    $region8: #{tpu_custom_call.1} parent=1 // pred_region
      %s26 = ssub.s32 2048, 2048
      %27 = vsyncadd [#allocation7], %s26
      %s28 = sshll.u32 [#allocation6], 4
      %s29 = int_to_ptr.vmem [resolvable:$true] %s28
      %34 = dma.hbm_to_vmem [thread:$0]  %s1, 2048, %s29, [#allocation7], 64, 64, 4
    $region9: #{tpu_custom_call.1} parent=1 // pred_fallthru
      _
    // Predicated region
    $region10: #{tpu_custom_call.1} parent=1 // pred_check
      _
    $region11: #{tpu_custom_call.1} parent=1 // pred_check_branch
      %36 = sbr.rel (0) target = $region13
    $region12: #{tpu_custom_call.1} parent=1 // pred_region
      _
    $region13: #{tpu_custom_call.1} parent=1 // pred_fallthru
      _
    // Predicated region
    $region14: #{tpu_custom_call.1} parent=1 // pred_check
      _
    $region15: #{tpu_custom_call.1} parent=1 // pred_check_branch
      %38 = sbr.rel (0) target = $region17
    $region16: #{tpu_custom_call.1} parent=1 // pred_region
      %39 = dma.done [#allocation4], 2048
    $region17: #{tpu_custom_call.1} parent=1 // pred_fallthru
      _
    // Predicated region
    $region18: #{tpu_custom_call.1} parent=1 // pred_check
      _
    $region19: #{tpu_custom_call.1} parent=1 // pred_check_branch
      %41 = sbr.rel (0) target = $region21
    $region20: #{tpu_custom_call.1} parent=1 // pred_region
      %42 = dma.done [#allocation7], 2048
    $region21: #{tpu_custom_call.1} parent=1 // pred_fallthru
      _
    %p44 = scmp.eq.s32.totalorder 0, 0
    // Predicated region
    $region22: #{tpu_custom_call.1} parent=1 // pred_check
      %p45 = pneg %p44
    $region23: #{tpu_custom_call.1} parent=1 // pred_check_branch
      %47 = sbr.rel (%p45) target = $region25
    $region24: #{tpu_custom_call.1} parent=1 // pred_region
      %48 = vst [vmem:[#allocation2] sm:$0xff] 0.0
      %49 = vst [vmem:[#allocation2 + $0x8] sm:$0xff] 0.0
      %50 = vst [vmem:[#allocation2 + $0x10] sm:$0xff] 0.0
      %51 = vst [vmem:[#allocation2 + $0x18] sm:$0xff] 0.0
      %52 = vst [vmem:[#allocation2 + $0x20] sm:$0xff] 0.0
      %53 = vst [vmem:[#allocation2 + $0x28] sm:$0xff] 0.0
      %54 = vst [vmem:[#allocation2 + $0x30] sm:$0xff] 0.0
      %55 = vst [vmem:[#allocation2 + $0x38] sm:$0xff] 0.0
      %56 = vst [vmem:[#allocation2 + $0x40] sm:$0xff] 0.0
      %57 = vst [vmem:[#allocation2 + $0x48] sm:$0xff] 0.0
      %58 = vst [vmem:[#allocation2 + $0x50] sm:$0xff] 0.0
      %59 = vst [vmem:[#allocation2 + $0x58] sm:$0xff] 0.0
      %60 = vst [vmem:[#allocation2 + $0x60] sm:$0xff] 0.0
      %61 = vst [vmem:[#allocation2 + $0x68] sm:$0xff] 0.0
      %62 = vst [vmem:[#allocation2 + $0x70] sm:$0xff] 0.0
      %63 = vst [vmem:[#allocation2 + $0x78] sm:$0xff] 0.0
    $region25: #{tpu_custom_call.1} parent=1 // pred_fallthru
      _
    %v64 = vld [vmem:[#allocation2] sm:$0xff]
    %v65 = vld [vmem:[#allocation2 + $0x8] sm:$0xff]
    %v66 = vld [vmem:[#allocation2 + $0x10] sm:$0xff]
    %v67 = vld [vmem:[#allocation2 + $0x18] sm:$0xff]
    %v68 = vld [vmem:[#allocation2 + $0x20] sm:$0xff]
    %v69 = vld [vmem:[#allocation2 + $0x28] sm:$0xff]
    %v70 = vld [vmem:[#allocation2 + $0x30] sm:$0xff]
    %v71 = vld [vmem:[#allocation2 + $0x38] sm:$0xff]
    %v72 = vld [vmem:[#allocation2 + $0x40] sm:$0xff]
    %v73 = vld [vmem:[#allocation2 + $0x48] sm:$0xff]
    %v74 = vld [vmem:[#allocation2 + $0x50] sm:$0xff]
    %v75 = vld [vmem:[#allocation2 + $0x58] sm:$0xff]
    %v76 = vld [vmem:[#allocation2 + $0x60] sm:$0xff]
    %v77 = vld [vmem:[#allocation2 + $0x68] sm:$0xff]
    %v78 = vld [vmem:[#allocation2 + $0x70] sm:$0xff]
    %v79 = vld [vmem:[#allocation2 + $0x78] sm:$0xff]
    %v80 = vld [vmem:[#allocation3] sm:$0xff]
    %v81 = vld [vmem:[#allocation3 + $0x8] sm:$0xff]
    %v82 = vld [vmem:[#allocation3 + $0x10] sm:$0xff]
    %v83 = vld [vmem:[#allocation3 + $0x18] sm:$0xff]
    %v84 = vld [vmem:[#allocation3 + $0x20] sm:$0xff]
    %v85 = vld [vmem:[#allocation3 + $0x28] sm:$0xff]
    %v86 = vld [vmem:[#allocation3 + $0x30] sm:$0xff]
    %v87 = vld [vmem:[#allocation3 + $0x38] sm:$0xff]
    %v88 = vld [vmem:[#allocation3 + $0x40] sm:$0xff]
    %v89 = vld [vmem:[#allocation3 + $0x48] sm:$0xff]
    %v90 = vld [vmem:[#allocation3 + $0x50] sm:$0xff]
    %v91 = vld [vmem:[#allocation3 + $0x58] sm:$0xff]
    %v92 = vld [vmem:[#allocation3 + $0x60] sm:$0xff]
    %v93 = vld [vmem:[#allocation3 + $0x68] sm:$0xff]
    %v94 = vld [vmem:[#allocation3 + $0x70] sm:$0xff]
    %v95 = vld [vmem:[#allocation3 + $0x78] sm:$0xff]
    %v96 = vld [vmem:[#allocation6] sm:$0xf]
    %v97 = vld [vmem:[#allocation6 + $0x4] sm:$0xf]
    %v98 = vld [vmem:[#allocation6 + $0x8] sm:$0xf]
    %v99 = vld [vmem:[#allocation6 + $0xc] sm:$0xf]
    %v100 = vld [vmem:[#allocation6 + $0x10] sm:$0xf]
    %v101 = vld [vmem:[#allocation6 + $0x14] sm:$0xf]
    %v102 = vld [vmem:[#allocation6 + $0x18] sm:$0xf]
    %v103 = vld [vmem:[#allocation6 + $0x1c] sm:$0xf]
    %v104 = vld [vmem:[#allocation6 + $0x20] sm:$0xf]
    %v105 = vld [vmem:[#allocation6 + $0x24] sm:$0xf]
    %v106 = vld [vmem:[#allocation6 + $0x28] sm:$0xf]
    %v107 = vld [vmem:[#allocation6 + $0x2c] sm:$0xf]
    %v108 = vld [vmem:[#allocation6 + $0x30] sm:$0xf]
    %v109 = vld [vmem:[#allocation6 + $0x34] sm:$0xf]
    %v110 = vld [vmem:[#allocation6 + $0x38] sm:$0xf]
    %v111 = vld [vmem:[#allocation6 + $0x3c] sm:$0xf]
    %v112 = vld [vmem:[#allocation6 + $0x40] sm:$0xf]
    %v113 = vld [vmem:[#allocation6 + $0x44] sm:$0xf]
    %v114 = vld [vmem:[#allocation6 + $0x48] sm:$0xf]
    %v115 = vld [vmem:[#allocation6 + $0x4c] sm:$0xf]
    %v116 = vld [vmem:[#allocation6 + $0x50] sm:$0xf]
    %v117 = vld [vmem:[#allocation6 + $0x54] sm:$0xf]
    %v118 = vld [vmem:[#allocation6 + $0x58] sm:$0xf]
    %v119 = vld [vmem:[#allocation6 + $0x5c] sm:$0xf]
    %v120 = vld [vmem:[#allocation6 + $0x60] sm:$0xf]
    %v121 = vld [vmem:[#allocation6 + $0x64] sm:$0xf]
    %v122 = vld [vmem:[#allocation6 + $0x68] sm:$0xf]
    %v123 = vld [vmem:[#allocation6 + $0x6c] sm:$0xf]
    %v124 = vld [vmem:[#allocation6 + $0x70] sm:$0xf]
    %v125 = vld [vmem:[#allocation6 + $0x74] sm:$0xf]
    %v126 = vld [vmem:[#allocation6 + $0x78] sm:$0xf]
    %v127 = vld [vmem:[#allocation6 + $0x7c] sm:$0xf]
    %v144 = vunpack.c.l.b16 %v80
    %v145 = vunpack.c.h.b16 %v80
    %v146 = vunpack.c.l.b16 %v81
    %v147 = vunpack.c.h.b16 %v81
    %v148 = vunpack.c.l.b16 %v82
    %v149 = vunpack.c.h.b16 %v82
    %v150 = vunpack.c.l.b16 %v83
    %v151 = vunpack.c.h.b16 %v83
    %v152 = vunpack.c.l.b16 %v84
    %v153 = vunpack.c.h.b16 %v84
    %v154 = vunpack.c.l.b16 %v85
    %v155 = vunpack.c.h.b16 %v85
    %v156 = vunpack.c.l.b16 %v86
    %v157 = vunpack.c.h.b16 %v86
    %v158 = vunpack.c.l.b16 %v87
    %v159 = vunpack.c.h.b16 %v87
    %v160 = vunpack.c.l.b16 %v88
    %v161 = vunpack.c.h.b16 %v88
    %v162 = vunpack.c.l.b16 %v89
    %v163 = vunpack.c.h.b16 %v89
    %v164 = vunpack.c.l.b16 %v90
    %v165 = vunpack.c.h.b16 %v90
    %v166 = vunpack.c.l.b16 %v91
    %v167 = vunpack.c.h.b16 %v91
    %v168 = vunpack.c.l.b16 %v92
    %v169 = vunpack.c.h.b16 %v92
    %v170 = vunpack.c.l.b16 %v93
    %v171 = vunpack.c.h.b16 %v93
    %v172 = vunpack.c.l.b16 %v94
    %v173 = vunpack.c.h.b16 %v94
    %v174 = vunpack.c.l.b16 %v95
    %v175 = vunpack.c.h.b16 %v95
    %v176 = vpack.c.b16 %v146, %v144
    %v177 = vpack.c.b16 %v147, %v145
    %v178 = vpack.c.b16 %v150, %v148
    %v179 = vpack.c.b16 %v151, %v149
    %v180 = vpack.c.b16 %v154, %v152
    %v181 = vpack.c.b16 %v155, %v153
    %v182 = vpack.c.b16 %v158, %v156
    %v183 = vpack.c.b16 %v159, %v157
    %v184 = vpack.c.b16 %v162, %v160
    %v185 = vpack.c.b16 %v163, %v161
    %v186 = vpack.c.b16 %v166, %v164
    %v187 = vpack.c.b16 %v167, %v165
    %v188 = vpack.c.b16 %v170, %v168
    %v189 = vpack.c.b16 %v171, %v169
    %v190 = vpack.c.b16 %v174, %v172
    %v191 = vpack.c.b16 %v175, %v173
    %v240 = vunpack.c.l.b16 %v96
    %v241 = vunpack.c.l.b16 %v97
    %v242 = vunpack.c.l.b16 %v98
    %v243 = vunpack.c.l.b16 %v99
    %v244 = vunpack.c.l.b16 %v100
    %v245 = vunpack.c.l.b16 %v101
    %v246 = vunpack.c.l.b16 %v102
    %v247 = vunpack.c.l.b16 %v103
    %v248 = vunpack.c.l.b16 %v104
    %v249 = vunpack.c.l.b16 %v105
    %v250 = vunpack.c.l.b16 %v106
    %v251 = vunpack.c.l.b16 %v107
    %v252 = vunpack.c.l.b16 %v108
    %v253 = vunpack.c.l.b16 %v109
    %v254 = vunpack.c.l.b16 %v110
    %v255 = vunpack.c.l.b16 %v111
    %v256 = vunpack.c.l.b16 %v112
    %v257 = vunpack.c.l.b16 %v113
    %v258 = vunpack.c.l.b16 %v114
    %v259 = vunpack.c.l.b16 %v115
    %v260 = vunpack.c.l.b16 %v116
    %v261 = vunpack.c.l.b16 %v117
    %v262 = vunpack.c.l.b16 %v118
    %v263 = vunpack.c.l.b16 %v119
    %v264 = vunpack.c.l.b16 %v120
    %v265 = vunpack.c.l.b16 %v121
    %v266 = vunpack.c.l.b16 %v122
    %v267 = vunpack.c.l.b16 %v123
    %v268 = vunpack.c.l.b16 %v124
    %v269 = vunpack.c.l.b16 %v125
    %v270 = vunpack.c.l.b16 %v126
    %v271 = vunpack.c.l.b16 %v127
    %v272 = vpack.c.b16 %v241, %v240
    %v273 = vpack.c.b16 %v243, %v242
    %v274 = vpack.c.b16 %v245, %v244
    %v275 = vpack.c.b16 %v247, %v246
    %v276 = vpack.c.b16 %v249, %v248
    %v277 = vpack.c.b16 %v251, %v250
    %v278 = vpack.c.b16 %v253, %v252
    %v279 = vpack.c.b16 %v255, %v254
    %v280 = vpack.c.b16 %v257, %v256
    %v281 = vpack.c.b16 %v259, %v258
    %v282 = vpack.c.b16 %v261, %v260
    %v283 = vpack.c.b16 %v263, %v262
    %v284 = vpack.c.b16 %v265, %v264
    %v285 = vpack.c.b16 %v267, %v266
    %v286 = vpack.c.b16 %v269, %v268
    %v287 = vpack.c.b16 %v271, %v270
    %304 = vmatprep.subr.bf16.mxu0 0
    %305 = vmatpush1.bf16.msra.mxu0 %v272
    %306 = vmatprep.subr.bf16.mxu0 0
    %307 = vmatpush1.bf16.msra.mxu0 %v273
    %308 = vmatprep.subr.bf16.mxu0 0
    %309 = vmatpush1.bf16.msra.mxu0 %v274
    %310 = vmatprep.subr.bf16.mxu0 0
    %311 = vmatpush1.bf16.msra.mxu0 %v275
    %312 = vmatprep.subr.bf16.mxu0 0
    %313 = vmatpush1.bf16.msra.mxu0 %v276
    %314 = vmatprep.subr.bf16.mxu0 0
    %315 = vmatpush1.bf16.msra.mxu0 %v277
    %316 = vmatprep.subr.bf16.mxu0 0
    %317 = vmatpush1.bf16.msra.mxu0 %v278
    %318 = vmatprep.subr.bf16.mxu0 0
    %319 = vmatpush1.bf16.msra.mxu0 %v279
    %320 = vmatprep.subr.bf16.mxu0 0
    %321 = vmatpush1.bf16.msra.mxu0 %v280
    %322 = vmatprep.subr.bf16.mxu0 0
    %323 = vmatpush1.bf16.msra.mxu0 %v281
    %324 = vmatprep.subr.bf16.mxu0 0
    %325 = vmatpush1.bf16.msra.mxu0 %v282
    %326 = vmatprep.subr.bf16.mxu0 0
    %327 = vmatpush1.bf16.msra.mxu0 %v283
    %328 = vmatprep.subr.bf16.mxu0 0
    %329 = vmatpush1.bf16.msra.mxu0 %v284
    %330 = vmatprep.subr.bf16.mxu0 0
    %331 = vmatpush1.bf16.msra.mxu0 %v285
    %332 = vmatprep.subr.bf16.mxu0 0
    %333 = vmatpush1.bf16.msra.mxu0 %v286
    %334 = vmatprep.subr.bf16.mxu0 0
    %335 = vmatpush1.bf16.msra.mxu0 %v287
    %336 = vmatprep.mubr.bf16.mxu0 %v177
    %337 = vmatmul.mubr.bf16.gmra.mrb[0].mxu0 %v176
    %v338 = vpop.f32.mrb[0].mxu0
    %v339 = vadd.f32 0.0, %v338
    %v340 = vpop.f32.mrb[0].mxu0
    %v341 = vpop.f32.mrb[0].mxu0
    %v342 = vadd.f32 0.0, %v341
    %v343 = vpop.f32.mrb[0].mxu0
    %344 = vmatprep.mubr.bf16.mxu0 %v179
    %345 = vmatmul.mubr.bf16.gmra.mrb[0].mxu0 %v178
    %v346 = vpop.f32.mrb[0].mxu0
    %v347 = vadd.f32 0.0, %v346
    %v348 = vpop.f32.mrb[0].mxu0
    %v349 = vpop.f32.mrb[0].mxu0
    %v350 = vadd.f32 0.0, %v349
    %v351 = vpop.f32.mrb[0].mxu0
    %352 = vmatprep.mubr.bf16.mxu0 %v181
    %353 = vmatmul.mubr.bf16.gmra.mrb[0].mxu0 %v180
    %v354 = vpop.f32.mrb[0].mxu0
    %v355 = vadd.f32 0.0, %v354
    %v356 = vpop.f32.mrb[0].mxu0
    %v357 = vpop.f32.mrb[0].mxu0
    %v358 = vadd.f32 0.0, %v357
    %v359 = vpop.f32.mrb[0].mxu0
    %360 = vmatprep.mubr.bf16.mxu0 %v183
    %361 = vmatmul.mubr.bf16.gmra.mrb[0].mxu0 %v182
    %v362 = vpop.f32.mrb[0].mxu0
    %v363 = vadd.f32 0.0, %v362
    %v364 = vpop.f32.mrb[0].mxu0
    %v365 = vpop.f32.mrb[0].mxu0
    %v366 = vadd.f32 0.0, %v365
    %v367 = vpop.f32.mrb[0].mxu0
    %368 = vmatprep.mubr.bf16.mxu0 %v185
    %369 = vmatmul.mubr.bf16.gmra.mrb[0].mxu0 %v184
    %v370 = vpop.f32.mrb[0].mxu0
    %v371 = vadd.f32 0.0, %v370
    %v372 = vpop.f32.mrb[0].mxu0
    %v373 = vpop.f32.mrb[0].mxu0
    %v374 = vadd.f32 0.0, %v373
    %v375 = vpop.f32.mrb[0].mxu0
    %376 = vmatprep.mubr.bf16.mxu0 %v187
    %377 = vmatmul.mubr.bf16.gmra.mrb[0].mxu0 %v186
    %v378 = vpop.f32.mrb[0].mxu0
    %v379 = vadd.f32 0.0, %v378
    %v380 = vpop.f32.mrb[0].mxu0
    %v381 = vpop.f32.mrb[0].mxu0
    %v382 = vadd.f32 0.0, %v381
    %v383 = vpop.f32.mrb[0].mxu0
    %384 = vmatprep.mubr.bf16.mxu0 %v189
    %385 = vmatmul.mubr.bf16.gmra.mrb[0].mxu0 %v188
    %v386 = vpop.f32.mrb[0].mxu0
    %v387 = vadd.f32 0.0, %v386
    %v388 = vpop.f32.mrb[0].mxu0
    %v389 = vpop.f32.mrb[0].mxu0
    %v390 = vadd.f32 0.0, %v389
    %v391 = vpop.f32.mrb[0].mxu0
    %392 = vmatprep.mubr.bf16.mxu0 %v191
    %393 = vmatmul.mubr.bf16.gmra.mrb[0].mxu0 %v190
    %v394 = vpop.f32.mrb[0].mxu0
    %v395 = vadd.f32 0.0, %v394
    %v396 = vpop.f32.mrb[0].mxu0
    %v397 = vpop.f32.mrb[0].mxu0
    %v398 = vadd.f32 0.0, %v397
    %v399 = vpop.f32.mrb[0].mxu0
    %400 = vdwg.mxu0
    %v401 = vadd.f32 %v64, %v339
    %v402 = vadd.f32 %v65, %v342
    %v403 = vadd.f32 %v66, %v347
    %v404 = vadd.f32 %v67, %v350
    %v405 = vadd.f32 %v68, %v355
    %v406 = vadd.f32 %v69, %v358
    %v407 = vadd.f32 %v70, %v363
    %v408 = vadd.f32 %v71, %v366
    %v409 = vadd.f32 %v72, %v371
    %v410 = vadd.f32 %v73, %v374
    %v411 = vadd.f32 %v74, %v379
    %v412 = vadd.f32 %v75, %v382
    %v413 = vadd.f32 %v76, %v387
    %v414 = vadd.f32 %v77, %v390
    %v415 = vadd.f32 %v78, %v395
    %v416 = vadd.f32 %v79, %v398
    %417 = vst [vmem:[#allocation2] sm:$0xff] %v401
    %418 = vst [vmem:[#allocation2 + $0x8] sm:$0xff] %v402
    %419 = vst [vmem:[#allocation2 + $0x10] sm:$0xff] %v403
    %420 = vst [vmem:[#allocation2 + $0x18] sm:$0xff] %v404
    %421 = vst [vmem:[#allocation2 + $0x20] sm:$0xff] %v405
    %422 = vst [vmem:[#allocation2 + $0x28] sm:$0xff] %v406
    %423 = vst [vmem:[#allocation2 + $0x30] sm:$0xff] %v407
    %424 = vst [vmem:[#allocation2 + $0x38] sm:$0xff] %v408
    %425 = vst [vmem:[#allocation2 + $0x40] sm:$0xff] %v409
    %426 = vst [vmem:[#allocation2 + $0x48] sm:$0xff] %v410
    %427 = vst [vmem:[#allocation2 + $0x50] sm:$0xff] %v411
    %428 = vst [vmem:[#allocation2 + $0x58] sm:$0xff] %v412
    %429 = vst [vmem:[#allocation2 + $0x60] sm:$0xff] %v413
    %430 = vst [vmem:[#allocation2 + $0x68] sm:$0xff] %v414
    %431 = vst [vmem:[#allocation2 + $0x70] sm:$0xff] %v415
    %432 = vst [vmem:[#allocation2 + $0x78] sm:$0xff] %v416
    // Predicated region
    $region26: #{tpu_custom_call.1} parent=1 // pred_check
      %p433 = pneg %p44
    $region27: #{tpu_custom_call.1} parent=1 // pred_check_branch
      %435 = sbr.rel (%p433) target = $region29
    $region28: #{tpu_custom_call.1} parent=1 // pred_region
      %v436 = vld [vmem:[#allocation2] sm:$0xff]
      %v437 = vld [vmem:[#allocation2 + $0x8] sm:$0xff]
      %v438 = vld [vmem:[#allocation2 + $0x10] sm:$0xff]
      %v439 = vld [vmem:[#allocation2 + $0x18] sm:$0xff]
      %v440 = vld [vmem:[#allocation2 + $0x20] sm:$0xff]
      %v441 = vld [vmem:[#allocation2 + $0x28] sm:$0xff]
      %v442 = vld [vmem:[#allocation2 + $0x30] sm:$0xff]
      %v443 = vld [vmem:[#allocation2 + $0x38] sm:$0xff]
      %v444 = vld [vmem:[#allocation2 + $0x40] sm:$0xff]
      %v445 = vld [vmem:[#allocation2 + $0x48] sm:$0xff]
      %v446 = vld [vmem:[#allocation2 + $0x50] sm:$0xff]
      %v447 = vld [vmem:[#allocation2 + $0x58] sm:$0xff]
      %v448 = vld [vmem:[#allocation2 + $0x60] sm:$0xff]
      %v449 = vld [vmem:[#allocation2 + $0x68] sm:$0xff]
      %v450 = vld [vmem:[#allocation2 + $0x70] sm:$0xff]
      %v451 = vld [vmem:[#allocation2 + $0x78] sm:$0xff]
      %v452 = vld [vmem:[%s2] sm:$0x1]
      %v454 = vlaneseq
      %v455 = vshrl.u32 %v454, 7
      %v456 = vsub.s32 0, %v455
      %v457 = vrot.slane %v452, %v456
      %v459 = vadd.f32 %v436, %v457
      %v460 = vadd.f32 %v437, %v457
      %v461 = vadd.f32 %v438, %v457
      %v462 = vadd.f32 %v439, %v457
      %v463 = vadd.f32 %v440, %v457
      %v464 = vadd.f32 %v441, %v457
      %v465 = vadd.f32 %v442, %v457
      %v466 = vadd.f32 %v443, %v457
      %v467 = vadd.f32 %v444, %v457
      %v468 = vadd.f32 %v445, %v457
      %v469 = vadd.f32 %v446, %v457
      %v470 = vadd.f32 %v447, %v457
      %v471 = vadd.f32 %v448, %v457
      %v472 = vadd.f32 %v449, %v457
      %v473 = vadd.f32 %v450, %v457
      %v474 = vadd.f32 %v451, %v457
      %v475 = vmax.f32 %v459, 0.0
      %v476 = vmax.f32 %v460, 0.0
      %v477 = vmax.f32 %v461, 0.0
      %v478 = vmax.f32 %v462, 0.0
      %v479 = vmax.f32 %v463, 0.0
      %v480 = vmax.f32 %v464, 0.0
      %v481 = vmax.f32 %v465, 0.0
      %v482 = vmax.f32 %v466, 0.0
      %v483 = vmax.f32 %v467, 0.0
      %v484 = vmax.f32 %v468, 0.0
      %v485 = vmax.f32 %v469, 0.0
      %v486 = vmax.f32 %v470, 0.0
      %v487 = vmax.f32 %v471, 0.0
      %v488 = vmax.f32 %v472, 0.0
      %v489 = vmax.f32 %v473, 0.0
      %v490 = vmax.f32 %v474, 0.0
      %v491 = vpack.c.bf16 %v476, %v475
      %v492 = vpack.c.bf16 %v478, %v477
      %v493 = vpack.c.bf16 %v480, %v479
      %v494 = vpack.c.bf16 %v482, %v481
      %v495 = vpack.c.bf16 %v484, %v483
      %v496 = vpack.c.bf16 %v486, %v485
      %v497 = vpack.c.bf16 %v488, %v487
      %v498 = vpack.c.bf16 %v490, %v489
      %v507 = vunpack.c.l.b16 %v491
      %v508 = vunpack.c.h.b16 %v491
      %v509 = vunpack.c.l.b16 %v492
      %v510 = vunpack.c.h.b16 %v492
      %v511 = vunpack.c.l.b16 %v493
      %v512 = vunpack.c.h.b16 %v493
      %v513 = vunpack.c.l.b16 %v494
      %v514 = vunpack.c.h.b16 %v494
      %v515 = vunpack.c.l.b16 %v495
      %v516 = vunpack.c.h.b16 %v495
      %v517 = vunpack.c.l.b16 %v496
      %v518 = vunpack.c.h.b16 %v496
      %v519 = vunpack.c.l.b16 %v497
      %v520 = vunpack.c.h.b16 %v497
      %v521 = vunpack.c.l.b16 %v498
      %v522 = vunpack.c.h.b16 %v498
      %v523 = vpack.c.b16 %v507, %v507
      %v524 = vpack.c.b16 %v508, %v508
      %v525 = vpack.c.b16 %v509, %v509
      %v526 = vpack.c.b16 %v510, %v510
      %v527 = vpack.c.b16 %v511, %v511
      %v528 = vpack.c.b16 %v512, %v512
      %v529 = vpack.c.b16 %v513, %v513
      %v530 = vpack.c.b16 %v514, %v514
      %v531 = vpack.c.b16 %v515, %v515
      %v532 = vpack.c.b16 %v516, %v516
      %v533 = vpack.c.b16 %v517, %v517
      %v534 = vpack.c.b16 %v518, %v518
      %v535 = vpack.c.b16 %v519, %v519
      %v536 = vpack.c.b16 %v520, %v520
      %v537 = vpack.c.b16 %v521, %v521
      %v538 = vpack.c.b16 %v522, %v522
      %555 = vst [vmem:[#allocation8] sm:$0xf] %v523
      %556 = vst [vmem:[#allocation8 + $0x4] sm:$0xf] %v524
      %557 = vst [vmem:[#allocation8 + $0x8] sm:$0xf] %v525
      %558 = vst [vmem:[#allocation8 + $0xc] sm:$0xf] %v526
      %559 = vst [vmem:[#allocation8 + $0x10] sm:$0xf] %v527
      %560 = vst [vmem:[#allocation8 + $0x14] sm:$0xf] %v528
      %561 = vst [vmem:[#allocation8 + $0x18] sm:$0xf] %v529
      %562 = vst [vmem:[#allocation8 + $0x1c] sm:$0xf] %v530
      %563 = vst [vmem:[#allocation8 + $0x20] sm:$0xf] %v531
      %564 = vst [vmem:[#allocation8 + $0x24] sm:$0xf] %v532
      %565 = vst [vmem:[#allocation8 + $0x28] sm:$0xf] %v533
      %566 = vst [vmem:[#allocation8 + $0x2c] sm:$0xf] %v534
      %567 = vst [vmem:[#allocation8 + $0x30] sm:$0xf] %v535
      %568 = vst [vmem:[#allocation8 + $0x34] sm:$0xf] %v536
      %569 = vst [vmem:[#allocation8 + $0x38] sm:$0xf] %v537
      %570 = vst [vmem:[#allocation8 + $0x3c] sm:$0xf] %v538
    $region29: #{tpu_custom_call.1} parent=1 // pred_fallthru
      _
    // Predicated region
    $region30: #{tpu_custom_call.1} parent=1 // pred_check
      _
    $region31: #{tpu_custom_call.1} parent=1 // pred_check_branch
      %572 = sbr.rel (0) target = $region33
    $region32: #{tpu_custom_call.1} parent=1 // pred_region
      %s574 = ssub.s32 1024, 1024
      %575 = vsyncadd [#allocation5], %s574
      %s576 = sshll.u32 [#allocation8], 4
      %s577 = int_to_ptr.vmem [resolvable:$true] %s576
      %582 = dma.vmem_to_hbm [thread:$0]  %s577, 1024, %s3, [#allocation5], 64, 64, 4
    $region33: #{tpu_custom_call.1} parent=1 // pred_fallthru
      _
    // Predicated region
    $region34: #{tpu_custom_call.1} parent=1 // pred_check
      _
    $region35: #{tpu_custom_call.1} parent=1 // pred_check_branch
      %584 = sbr.rel (0) target = $region37
    $region36: #{tpu_custom_call.1} parent=1 // pred_region
      %585 = dma.done [#allocation5], 1024
    $region37: #{tpu_custom_call.1} parent=1 // pred_fallthru
      _
    %586 = vsyncpa [#allocation4], 1
    %587 = vsyncpa [#allocation7], 1
    %588 = vsyncpa [#allocation5], 1

</llo_original>
